<compile_context>
chip_gen: v6e
topology: v6e:2x2x1
jax: 0.10.0
libtpu: 0.0.40
codegen_flags: <defaults>
</compile_context>

<pallas_src>
import jax
import jax.numpy as jnp
from jax.experimental import pallas as pl
from jax.experimental.pallas import tpu as pltpu

T = 100            # rollout length (matches the PyTorch global `T`)
STATE_DIM = 6
ACTION_DIM = 2
BATCH = 2


def simulation_kernel(state_ref, wc_ref, a_ref, b_ref, l_ref, err_ref):
    """Full T-step rollout + terminal quadratic cost, fully fused.

    state_ref: [B, S]   initial state
    wc_ref:    [S, A]   controller weights   (action = state @ Wc)
    a_ref:     [S, S]   dynamics state map   (state' = state @ A + action @ B)
    b_ref:     [A, S]   dynamics action map
    l_ref:     [1, S]   diagonal cost weights [10, 1, 10, 1, 10, 1]
    err_ref:   [1, 1]   scalar output: sum_b sum_i l_i * state_T[b, i]^2
    """
    # Fuse controller + dynamics into one effective transition matrix:
    #   state' = state @ A + (state @ Wc) @ B = state @ (A + Wc @ B)
    m = a_ref[...] + jnp.dot(wc_ref[...], b_ref[...],
                             preferred_element_type=jnp.float32)

    # M^T by binary exponentiation, statically unrolled (T is a Python const).
    # For T=100: 6 squarings + 2 multiplies = 8 serial MXU matmuls total.
    n = T
    base = m
    m_pow = None            # will hold M^T (T >= 1 here)
    while n > 0:
        if n & 1:
            m_pow = base if m_pow is None else jnp.dot(
                m_pow, base, preferred_element_type=jnp.float32)
        n >>= 1
        if n:
            base = jnp.dot(base, base, preferred_element_type=jnp.float32)

    s_final = jnp.dot(state_ref[...], m_pow,
                      preferred_element_type=jnp.float32)

    # error(state_T) = sum_b sum_i l_i * state_T[b, i]^2
    err = jnp.sum(l_ref[...] * s_final * s_final)
    err_ref[...] = err.reshape(1, 1)


def simulation_forward(state, wc, a_dyn, b_dyn, l_weights):
    vmem = pl.BlockSpec(memory_space=pltpu.MemorySpace.VMEM)
    out = pl.pallas_call(
        simulation_kernel,
        out_shape=jax.ShapeDtypeStruct((1, 1), jnp.float32),
        in_specs=[vmem, vmem, vmem, vmem, vmem],
        out_specs=vmem,
        # Advisory hint so XLA doesn't treat the opaque call as heavy.
        cost_estimate=pl.CostEstimate(
            flops=3840, transcendentals=0, bytes_accessed=320),
    )(state, wc, a_dyn, b_dyn, l_weights)
    return out[0, 0]


def reference_forward(state, wc, a_dyn, b_dyn, l_weights):
    # Literal per-step rollout, matching the PyTorch forward(), in full f32.
    hi = jax.lax.Precision.HIGHEST
    s = state
    for _ in range(T):
        action = jnp.dot(s, wc, precision=hi)
        s = jnp.dot(s, a_dyn, precision=hi) + jnp.dot(action, b_dyn, precision=hi)
    return jnp.sum(l_weights * s * s)


if __name__ == "__main__":
    key = jax.random.PRNGKey(0)
    k_wc, k_a, k_b = jax.random.split(key, 3)

    # initialize_state() from the PyTorch module.
    state0 = jnp.array(
        [[4.0, 0.2, -3.0, 0.2, 1.0, 0.0],
         [4.0, 0.2, -3.0, 0.2, 1.0, 0.0]], dtype=jnp.float32)

    # Deterministic synthetic parameters (stable linear system).
    wc = 0.1 * jax.random.normal(k_wc, (STATE_DIM, ACTION_DIM), jnp.float32)
    a_dyn = (0.9 * jnp.eye(STATE_DIM, dtype=jnp.float32)
             + 0.01 * jax.random.normal(k_a, (STATE_DIM, STATE_DIM), jnp.float32))
    b_dyn = 0.1 * jax.random.normal(k_b, (ACTION_DIM, STATE_DIM), jnp.float32)

    # error(): l1..l6 = [10, 1, 10, 1, 10, 1]
    l_weights = jnp.array([[10.0, 1.0, 10.0, 1.0, 10.0, 1.0]], dtype=jnp.float32)

    err = simulation_forward(state0, wc, a_dyn, b_dyn, l_weights)
    err = jax.block_until_ready(err)

    ref = reference_forward(state0, wc, a_dyn, b_dyn, l_weights)
    ref = jax.block_until_ready(ref)

    # The fused / repeated-squaring rollout only changes FP accumulation
    # order; for this stable system (spectral radius < 1) the results agree
    # well within these tolerances.
    assert jnp.allclose(err, ref, rtol=1e-3, atol=1e-7), (err, ref)

    print("KERNEL_OK")
</pallas_src>

<mosaic_0001>
module attributes {stable_mosaic.version = 11 : i64} {
  func.func @simulation_kernel(%arg0: memref<2x6xf32, #tpu.memory_space<vmem>>, %arg1: memref<6x2xf32, #tpu.memory_space<vmem>>, %arg2: memref<6x6xf32, #tpu.memory_space<vmem>>, %arg3: memref<2x6xf32, #tpu.memory_space<vmem>>, %arg4: memref<1x6xf32, #tpu.memory_space<vmem>>, %arg5: memref<1x1xf32, #tpu.memory_space<vmem>>) attributes {dimension_semantics = [], scalar_prefetch = 0 : i64, scratch_operands = 0 : i64, tpu.core_type = #tpu.core_type<tc>} {
    %c0 = arith.constant 0 : index
    %c0_0 = arith.constant 0 : index
    %0 = vector.load %arg2[%c0, %c0_0] : memref<6x6xf32, #tpu.memory_space<vmem>>, vector<6x6xf32>
    %c0_1 = arith.constant 0 : index
    %c0_2 = arith.constant 0 : index
    %1 = vector.load %arg1[%c0_1, %c0_2] : memref<6x2xf32, #tpu.memory_space<vmem>>, vector<6x2xf32>
    %c0_3 = arith.constant 0 : index
    %c0_4 = arith.constant 0 : index
    %2 = vector.load %arg3[%c0_3, %c0_4] : memref<2x6xf32, #tpu.memory_space<vmem>>, vector<2x6xf32>
    %cst = arith.constant dense<0.000000e+00> : vector<6x6xf32>
    %3 = tpu.matmul %1, %2, %cst {dimension_numbers = #tpu.dot_dimension_numbers<[1], [0], [0], [1], [0, 0, 1, 1], [], []>} : vector<6x2xf32>, vector<2x6xf32>, vector<6x6xf32> -> vector<6x6xf32>
    %4 = arith.addf %0, %3 : vector<6x6xf32>
    %cst_5 = arith.constant dense<0.000000e+00> : vector<6x6xf32>
    %5 = tpu.matmul %4, %4, %cst_5 {dimension_numbers = #tpu.dot_dimension_numbers<[1], [0], [0], [1], [0, 0, 1, 1], [], []>} : vector<6x6xf32>, vector<6x6xf32>, vector<6x6xf32> -> vector<6x6xf32>
    %cst_6 = arith.constant dense<0.000000e+00> : vector<6x6xf32>
    %6 = tpu.matmul %5, %5, %cst_6 {dimension_numbers = #tpu.dot_dimension_numbers<[1], [0], [0], [1], [0, 0, 1, 1], [], []>} : vector<6x6xf32>, vector<6x6xf32>, vector<6x6xf32> -> vector<6x6xf32>
    %cst_7 = arith.constant dense<0.000000e+00> : vector<6x6xf32>
    %7 = tpu.matmul %6, %6, %cst_7 {dimension_numbers = #tpu.dot_dimension_numbers<[1], [0], [0], [1], [0, 0, 1, 1], [], []>} : vector<6x6xf32>, vector<6x6xf32>, vector<6x6xf32> -> vector<6x6xf32>
    %cst_8 = arith.constant dense<0.000000e+00> : vector<6x6xf32>
    %8 = tpu.matmul %7, %7, %cst_8 {dimension_numbers = #tpu.dot_dimension_numbers<[1], [0], [0], [1], [0, 0, 1, 1], [], []>} : vector<6x6xf32>, vector<6x6xf32>, vector<6x6xf32> -> vector<6x6xf32>
    %cst_9 = arith.constant dense<0.000000e+00> : vector<6x6xf32>
    %9 = tpu.matmul %8, %8, %cst_9 {dimension_numbers = #tpu.dot_dimension_numbers<[1], [0], [0], [1], [0, 0, 1, 1], [], []>} : vector<6x6xf32>, vector<6x6xf32>, vector<6x6xf32> -> vector<6x6xf32>
    %cst_10 = arith.constant dense<0.000000e+00> : vector<6x6xf32>
    %10 = tpu.matmul %6, %9, %cst_10 {dimension_numbers = #tpu.dot_dimension_numbers<[1], [0], [0], [1], [0, 0, 1, 1], [], []>} : vector<6x6xf32>, vector<6x6xf32>, vector<6x6xf32> -> vector<6x6xf32>
    %cst_11 = arith.constant dense<0.000000e+00> : vector<6x6xf32>
    %11 = tpu.matmul %9, %9, %cst_11 {dimension_numbers = #tpu.dot_dimension_numbers<[1], [0], [0], [1], [0, 0, 1, 1], [], []>} : vector<6x6xf32>, vector<6x6xf32>, vector<6x6xf32> -> vector<6x6xf32>
    %cst_12 = arith.constant dense<0.000000e+00> : vector<6x6xf32>
    %12 = tpu.matmul %10, %11, %cst_12 {dimension_numbers = #tpu.dot_dimension_numbers<[1], [0], [0], [1], [0, 0, 1, 1], [], []>} : vector<6x6xf32>, vector<6x6xf32>, vector<6x6xf32> -> vector<6x6xf32>
    %c0_13 = arith.constant 0 : index
    %c0_14 = arith.constant 0 : index
    %13 = vector.load %arg0[%c0_13, %c0_14] : memref<2x6xf32, #tpu.memory_space<vmem>>, vector<2x6xf32>
    %cst_15 = arith.constant dense<0.000000e+00> : vector<2x6xf32>
    %14 = tpu.matmul %13, %12, %cst_15 {dimension_numbers = #tpu.dot_dimension_numbers<[1], [0], [0], [1], [0, 0, 1, 1], [], []>} : vector<2x6xf32>, vector<6x6xf32>, vector<2x6xf32> -> vector<2x6xf32>
    %c0_16 = arith.constant 0 : index
    %c0_17 = arith.constant 0 : index
    %15 = vector.load %arg4[%c0_16, %c0_17] : memref<1x6xf32, #tpu.memory_space<vmem>>, vector<1x6xf32>
    %16 = vector.broadcast %15 : vector<1x6xf32> to vector<2x6xf32>
    %17 = arith.mulf %16, %14 : vector<2x6xf32>
    %18 = arith.mulf %17, %14 : vector<2x6xf32>
    %19 = vector.shape_cast %18 : vector<2x6xf32> to vector<1x2x6xf32>
    %cst_18 = arith.constant dense<0.000000e+00> : vector<1xf32>
    %20 = vector.multi_reduction <add>, %19, %cst_18 [1, 2] : vector<1x2x6xf32> to vector<1xf32>
    %21 = vector.shape_cast %20 : vector<1xf32> to vector<1x1x1xf32>
    %22 = vector.extract %21[0, 0, 0] : f32 from vector<1x1x1xf32>
    %23 = vector.broadcast %22 : f32 to vector<1x1xf32>
    %c0_19 = arith.constant 0 : index
    %c0_20 = arith.constant 0 : index
    %24 = vector.load %arg5[%c0_19, %c0_20] : memref<1x1xf32, #tpu.memory_space<vmem>>, vector<1x1xf32>
    tpu.vector_store %arg5[%c0_19, %c0_20], %23 {strides = array<i32>} : memref<1x1xf32, #tpu.memory_space<vmem>>, vector<1x1xf32>,
    return
  }
}

</mosaic_0001>

<llo_original>
// kernel: tpu_custom_call.1
$region0: #{tpu_custom_call.1}
  #allocation0 [shape = 'u32[]', space=smem, size = 0x4, offset = 0x4, fixed_abs, tag = 'smem constant byte address 0x4 - core index']
  #allocation1 [shape = 'u32[144,128]{1,0:T(1,128)}', space=vmem, size = 0x12000, scoped, tag = 'internal scratch']
  %s0 = inlined_call_operand.vmem [shape: f32[2,6], index: 0, kind: input, shape index: {}]
  %s1 = inlined_call_operand.vmem [shape: f32[6,2], index: 1, kind: input, shape index: {}]
  %s2 = inlined_call_operand.vmem [shape: f32[6,6], index: 2, kind: input, shape index: {}]
  %s3 = inlined_call_operand.vmem [shape: f32[2,6], index: 3, kind: input, shape index: {}]
  %s4 = inlined_call_operand.vmem [shape: f32[1,6], index: 4, kind: input, shape index: {}]
  %s5 = inlined_call_operand.hbm [shape: f32[1,1], index: 5, kind: output, shape index: {}]
  %s6 = sld [smem:[#allocation0]]
  $region30: #{tpu_custom_call.1} parent=0
    _
  %s8 = ssub.s32 1, %s6
  %s9 = scalar_select 0, %s8, %s6
  $region1: #{tpu_custom_call.1} parent=0
    #allocation2 [shape = 'u8[512]{0}', space=vmem, size = 0x400, scoped, tag = 'output window, operand 0, single buffered']
    #allocation3 [shape = 's32[1]{0}', space=sflag, size = 0x4, scoped, tag = 'scoped memory for tpu_custom_call.1']
    %10 = vsyncpa [#allocation3], 0
    // Predicated region
    $region2: #{tpu_custom_call.1} parent=1 // pred_check
      _
    $region3: #{tpu_custom_call.1} parent=1 // pred_check_branch
      %12 = sbr.rel (0) target = $region5
    $region4: #{tpu_custom_call.1} parent=1 // pred_region
      _
    $region5: #{tpu_custom_call.1} parent=1 // pred_fallthru
      _
    // Predicated region
    $region6: #{tpu_custom_call.1} parent=1 // pred_check
      _
    $region7: #{tpu_custom_call.1} parent=1 // pred_check_branch
      %14 = sbr.rel (0) target = $region9
    $region8: #{tpu_custom_call.1} parent=1 // pred_region
      _
    $region9: #{tpu_custom_call.1} parent=1 // pred_fallthru
      _
    // Predicated region
    $region10: #{tpu_custom_call.1} parent=1 // pred_check
      _
    $region11: #{tpu_custom_call.1} parent=1 // pred_check_branch
      %16 = sbr.rel (0) target = $region13
    $region12: #{tpu_custom_call.1} parent=1 // pred_region
      _
    $region13: #{tpu_custom_call.1} parent=1 // pred_fallthru
      _
    // Predicated region
    $region14: #{tpu_custom_call.1} parent=1 // pred_check
      _
    $region15: #{tpu_custom_call.1} parent=1 // pred_check_branch
      %18 = sbr.rel (0) target = $region17
    $region16: #{tpu_custom_call.1} parent=1 // pred_region
      _
    $region17: #{tpu_custom_call.1} parent=1 // pred_fallthru
      _
    // Predicated region
    $region18: #{tpu_custom_call.1} parent=1 // pred_check
      _
    $region19: #{tpu_custom_call.1} parent=1 // pred_check_branch
      %20 = sbr.rel (0) target = $region21
    $region20: #{tpu_custom_call.1} parent=1 // pred_region
      _
    $region21: #{tpu_custom_call.1} parent=1 // pred_fallthru
      _
    %v21 = vld [vmem:[%s2] sm:$0x3f]
    %v22 = vld [vmem:[%s1] sm:$0x3f]
    %v23 = vld [vmem:[%s3] sm:$0x3]
    %vm24 = vcmask 15360
    %v26 = vsel %vm24, %v22, 0
    %vm28 = vcmask 1041408
    %v30 = vsel %vm28, %v23, 0
    %32 = vmatprep.subr.mxu0 0.0
    %33 = vmatpush1.msra.mxu0 0.0
    %34 = vmatprep.subr.mxu0 0.0
    %35 = vmatpush1.msra.mxu0 0.0
    %36 = vmatprep.subr.mxu0 0.0
    %37 = vmatpush1.msra.mxu0 0.0
    %38 = vmatprep.subr.mxu0 0.0
    %39 = vmatpush1.msra.mxu0 0.0
    %40 = vmatprep.subr.mxu0 0.0
    %41 = vmatpush1.msra.mxu0 0.0
    %42 = vmatprep.subr.mxu0 0.0
    %43 = vmatpush1.msra.mxu0 0.0
    %44 = vmatprep.subr.mxu0 0.0
    %45 = vmatpush1.msra.mxu0 0.0
    %46 = vmatprep.subr.mxu0 0.0
    %47 = vmatpush1.msra.mxu0 0.0
    %48 = vmatprep.subr.mxu0 0.0
    %49 = vmatpush1.msra.mxu0 0.0
    %50 = vmatprep.subr.mxu0 0.0
    %51 = vmatpush1.msra.mxu0 0.0
    %52 = vmatprep.subr.mxu0 0.0
    %53 = vmatpush1.msra.mxu0 0.0
    %54 = vmatprep.subr.mxu0 0.0
    %55 = vmatpush1.msra.mxu0 0.0
    %56 = vmatprep.subr.mxu0 0.0
    %57 = vmatpush1.msra.mxu0 0.0
    %58 = vmatprep.subr.mxu0 0.0
    %59 = vmatpush1.msra.mxu0 0.0
    %60 = vmatprep.subr.mxu0 0.0
    %61 = vmatpush1.msra.mxu0 0.0
    %62 = vmatprep.subr.mxu0 0.0
    %63 = vmatpush1.msra.mxu0 %v30
    %64 = vmatprep.subr.mxu0 0.0
    %65 = vmatpush2.msra.mxu0 0.0
    %66 = vmatprep.subr.mxu0 0.0
    %67 = vmatpush2.msra.mxu0 0.0
    %68 = vmatprep.subr.mxu0 0.0
    %69 = vmatpush2.msra.mxu0 0.0
    %70 = vmatprep.subr.mxu0 0.0
    %71 = vmatpush2.msra.mxu0 0.0
    %72 = vmatprep.subr.mxu0 0.0
    %73 = vmatpush2.msra.mxu0 0.0
    %74 = vmatprep.subr.mxu0 0.0
    %75 = vmatpush2.msra.mxu0 0.0
    %76 = vmatprep.subr.mxu0 0.0
    %77 = vmatpush2.msra.mxu0 0.0
    %78 = vmatprep.subr.mxu0 0.0
    %79 = vmatpush2.msra.mxu0 0.0
    %80 = vmatprep.subr.mxu0 0.0
    %81 = vmatpush2.msra.mxu0 0.0
    %82 = vmatprep.subr.mxu0 0.0
    %83 = vmatpush2.msra.mxu0 0.0
    %84 = vmatprep.subr.mxu0 0.0
    %85 = vmatpush2.msra.mxu0 0.0
    %86 = vmatprep.subr.mxu0 0.0
    %87 = vmatpush2.msra.mxu0 0.0
    %88 = vmatprep.subr.mxu0 0.0
    %89 = vmatpush2.msra.mxu0 0.0
    %90 = vmatprep.subr.mxu0 0.0
    %91 = vmatpush2.msra.mxu0 0.0
    %92 = vmatprep.subr.mxu0 0.0
    %93 = vmatpush2.msra.mxu0 0.0
    %94 = vmatprep.subr.mxu0 0.0
    %95 = vmatpush2.msra.mxu0 0.0
    %96 = vmatprep.mubr.f32.mxu0 0.0
    %97 = vmatmul.mubr.f32.gmra.mxu0 %v26
    %v98 = vpop.f32.mrf.mxu0
    %v99 = vadd.f32 0.0, %v98
    %v100 = vpop.f32.mrf.mxu0
    %101 = vdwg.mxu0
    %v102 = vadd.f32 %v21, %v99
    %vm103 = vcmask 48128
    %v105 = vsel %vm103, %v102, 0
    %vm107 = vcmask 1045504
    %v108 = vsel %vm107, %v102, 0
    %110 = vmatprep.subr.mxu0 0.0
    %111 = vmatpush1.msra.mxu0 0.0
    %112 = vmatprep.subr.mxu0 0.0
    %113 = vmatpush1.msra.mxu0 0.0
    %114 = vmatprep.subr.mxu0 0.0
    %115 = vmatpush1.msra.mxu0 0.0
    %116 = vmatprep.subr.mxu0 0.0
    %117 = vmatpush1.msra.mxu0 0.0
    %118 = vmatprep.subr.mxu0 0.0
    %119 = vmatpush1.msra.mxu0 0.0
    %120 = vmatprep.subr.mxu0 0.0
    %121 = vmatpush1.msra.mxu0 0.0
    %122 = vmatprep.subr.mxu0 0.0
    %123 = vmatpush1.msra.mxu0 0.0
    %124 = vmatprep.subr.mxu0 0.0
    %125 = vmatpush1.msra.mxu0 0.0
    %126 = vmatprep.subr.mxu0 0.0
    %127 = vmatpush1.msra.mxu0 0.0
    %128 = vmatprep.subr.mxu0 0.0
    %129 = vmatpush1.msra.mxu0 0.0
    %130 = vmatprep.subr.mxu0 0.0
    %131 = vmatpush1.msra.mxu0 0.0
    %132 = vmatprep.subr.mxu0 0.0
    %133 = vmatpush1.msra.mxu0 0.0
    %134 = vmatprep.subr.mxu0 0.0
    %135 = vmatpush1.msra.mxu0 0.0
    %136 = vmatprep.subr.mxu0 0.0
    %137 = vmatpush1.msra.mxu0 0.0
    %138 = vmatprep.subr.mxu0 0.0
    %139 = vmatpush1.msra.mxu0 0.0
    %140 = vmatprep.subr.mxu0 0.0
    %141 = vmatpush1.msra.mxu0 %v108
    %142 = vmatprep.subr.mxu0 0.0
    %143 = vmatpush2.msra.mxu0 0.0
    %144 = vmatprep.subr.mxu0 0.0
    %145 = vmatpush2.msra.mxu0 0.0
    %146 = vmatprep.subr.mxu0 0.0
    %147 = vmatpush2.msra.mxu0 0.0
    %148 = vmatprep.subr.mxu0 0.0
    %149 = vmatpush2.msra.mxu0 0.0
    %150 = vmatprep.subr.mxu0 0.0
    %151 = vmatpush2.msra.mxu0 0.0
    %152 = vmatprep.subr.mxu0 0.0
    %153 = vmatpush2.msra.mxu0 0.0
    %154 = vmatprep.subr.mxu0 0.0
    %155 = vmatpush2.msra.mxu0 0.0
    %156 = vmatprep.subr.mxu0 0.0
    %157 = vmatpush2.msra.mxu0 0.0
    %158 = vmatprep.subr.mxu0 0.0
    %159 = vmatpush2.msra.mxu0 0.0
    %160 = vmatprep.subr.mxu0 0.0
    %161 = vmatpush2.msra.mxu0 0.0
    %162 = vmatprep.subr.mxu0 0.0
    %163 = vmatpush2.msra.mxu0 0.0
    %164 = vmatprep.subr.mxu0 0.0
    %165 = vmatpush2.msra.mxu0 0.0
    %166 = vmatprep.subr.mxu0 0.0
    %167 = vmatpush2.msra.mxu0 0.0
    %168 = vmatprep.subr.mxu0 0.0
    %169 = vmatpush2.msra.mxu0 0.0
    %170 = vmatprep.subr.mxu0 0.0
    %171 = vmatpush2.msra.mxu0 0.0
    %172 = vmatprep.subr.mxu0 0.0
    %173 = vmatpush2.msra.mxu0 0.0
    %174 = vmatprep.mubr.f32.mxu0 0.0
    %175 = vmatmul.mubr.f32.gmra.mxu0 %v105
    %v176 = vpop.f32.mrf.mxu0
    %v177 = vadd.f32 0.0, %v176
    %v178 = vpop.f32.mrf.mxu0
    %179 = vdwg.mxu0
    %v181 = vsel %vm103, %v177, 0
    %v183 = vsel %vm107, %v177, 0
    %185 = vmatprep.subr.mxu0 0.0
    %186 = vmatpush1.msra.mxu0 0.0
    %187 = vmatprep.subr.mxu0 0.0
    %188 = vmatpush1.msra.mxu0 0.0
    %189 = vmatprep.subr.mxu0 0.0
    %190 = vmatpush1.msra.mxu0 0.0
    %191 = vmatprep.subr.mxu0 0.0
    %192 = vmatpush1.msra.mxu0 0.0
    %193 = vmatprep.subr.mxu0 0.0
    %194 = vmatpush1.msra.mxu0 0.0
    %195 = vmatprep.subr.mxu0 0.0
    %196 = vmatpush1.msra.mxu0 0.0
    %197 = vmatprep.subr.mxu0 0.0
    %198 = vmatpush1.msra.mxu0 0.0
    %199 = vmatprep.subr.mxu0 0.0
    %200 = vmatpush1.msra.mxu0 0.0
    %201 = vmatprep.subr.mxu0 0.0
    %202 = vmatpush1.msra.mxu0 0.0
    %203 = vmatprep.subr.mxu0 0.0
    %204 = vmatpush1.msra.mxu0 0.0
    %205 = vmatprep.subr.mxu0 0.0
    %206 = vmatpush1.msra.mxu0 0.0
    %207 = vmatprep.subr.mxu0 0.0
    %208 = vmatpush1.msra.mxu0 0.0
    %209 = vmatprep.subr.mxu0 0.0
    %210 = vmatpush1.msra.mxu0 0.0
    %211 = vmatprep.subr.mxu0 0.0
    %212 = vmatpush1.msra.mxu0 0.0
    %213 = vmatprep.subr.mxu0 0.0
    %214 = vmatpush1.msra.mxu0 0.0
    %215 = vmatprep.subr.mxu0 0.0
    %216 = vmatpush1.msra.mxu0 %v183
    %217 = vmatprep.subr.mxu0 0.0
    %218 = vmatpush2.msra.mxu0 0.0
    %219 = vmatprep.subr.mxu0 0.0
    %220 = vmatpush2.msra.mxu0 0.0
    %221 = vmatprep.subr.mxu0 0.0
    %222 = vmatpush2.msra.mxu0 0.0
    %223 = vmatprep.subr.mxu0 0.0
    %224 = vmatpush2.msra.mxu0 0.0
    %225 = vmatprep.subr.mxu0 0.0
    %226 = vmatpush2.msra.mxu0 0.0
    %227 = vmatprep.subr.mxu0 0.0
    %228 = vmatpush2.msra.mxu0 0.0
    %229 = vmatprep.subr.mxu0 0.0
    %230 = vmatpush2.msra.mxu0 0.0
    %231 = vmatprep.subr.mxu0 0.0
    %232 = vmatpush2.msra.mxu0 0.0
    %233 = vmatprep.subr.mxu0 0.0
    %234 = vmatpush2.msra.mxu0 0.0
    %235 = vmatprep.subr.mxu0 0.0
    %236 = vmatpush2.msra.mxu0 0.0
    %237 = vmatprep.subr.mxu0 0.0
    %238 = vmatpush2.msra.mxu0 0.0
    %239 = vmatprep.subr.mxu0 0.0
    %240 = vmatpush2.msra.mxu0 0.0
    %241 = vmatprep.subr.mxu0 0.0
    %242 = vmatpush2.msra.mxu0 0.0
    %243 = vmatprep.subr.mxu0 0.0
    %244 = vmatpush2.msra.mxu0 0.0
    %245 = vmatprep.subr.mxu0 0.0
    %246 = vmatpush2.msra.mxu0 0.0
    %247 = vmatprep.subr.mxu0 0.0
    %248 = vmatpush2.msra.mxu0 0.0
    %249 = vmatprep.mubr.f32.mxu0 0.0
    %250 = vmatmul.mubr.f32.gmra.mxu0 %v181
    %v251 = vpop.f32.mrf.mxu0
    %v252 = vadd.f32 0.0, %v251
    %v253 = vpop.f32.mrf.mxu0
    %254 = vdwg.mxu0
    %v256 = vsel %vm103, %v252, 0
    %v258 = vsel %vm107, %v252, 0
    %260 = vmatprep.subr.mxu0 0.0
    %261 = vmatpush1.msra.mxu0 0.0
    %262 = vmatprep.subr.mxu0 0.0
    %263 = vmatpush1.msra.mxu0 0.0
    %264 = vmatprep.subr.mxu0 0.0
    %265 = vmatpush1.msra.mxu0 0.0
    %266 = vmatprep.subr.mxu0 0.0
    %267 = vmatpush1.msra.mxu0 0.0
    %268 = vmatprep.subr.mxu0 0.0
    %269 = vmatpush1.msra.mxu0 0.0
    %270 = vmatprep.subr.mxu0 0.0
    %271 = vmatpush1.msra.mxu0 0.0
    %272 = vmatprep.subr.mxu0 0.0
    %273 = vmatpush1.msra.mxu0 0.0
    %274 = vmatprep.subr.mxu0 0.0
    %275 = vmatpush1.msra.mxu0 0.0
    %276 = vmatprep.subr.mxu0 0.0
    %277 = vmatpush1.msra.mxu0 0.0
    %278 = vmatprep.subr.mxu0 0.0
    %279 = vmatpush1.msra.mxu0 0.0
    %280 = vmatprep.subr.mxu0 0.0
    %281 = vmatpush1.msra.mxu0 0.0
    %282 = vmatprep.subr.mxu0 0.0
    %283 = vmatpush1.msra.mxu0 0.0
    %284 = vmatprep.subr.mxu0 0.0
    %285 = vmatpush1.msra.mxu0 0.0
    %286 = vmatprep.subr.mxu0 0.0
    %287 = vmatpush1.msra.mxu0 0.0
    %288 = vmatprep.subr.mxu0 0.0
    %289 = vmatpush1.msra.mxu0 0.0
    %290 = vmatprep.subr.mxu0 0.0
    %291 = vmatpush1.msra.mxu0 %v258
    %292 = vmatprep.subr.mxu0 0.0
    %293 = vmatpush2.msra.mxu0 0.0
    %294 = vmatprep.subr.mxu0 0.0
    %295 = vmatpush2.msra.mxu0 0.0
    %296 = vmatprep.subr.mxu0 0.0
    %297 = vmatpush2.msra.mxu0 0.0
    %298 = vmatprep.subr.mxu0 0.0
    %299 = vmatpush2.msra.mxu0 0.0
    %300 = vmatprep.subr.mxu0 0.0
    %301 = vmatpush2.msra.mxu0 0.0
    %302 = vmatprep.subr.mxu0 0.0
    %303 = vmatpush2.msra.mxu0 0.0
    %304 = vmatprep.subr.mxu0 0.0
    %305 = vmatpush2.msra.mxu0 0.0
    %306 = vmatprep.subr.mxu0 0.0
    %307 = vmatpush2.msra.mxu0 0.0
    %308 = vmatprep.subr.mxu0 0.0
    %309 = vmatpush2.msra.mxu0 0.0
    %310 = vmatprep.subr.mxu0 0.0
    %311 = vmatpush2.msra.mxu0 0.0
    %312 = vmatprep.subr.mxu0 0.0
    %313 = vmatpush2.msra.mxu0 0.0
    %314 = vmatprep.subr.mxu0 0.0
    %315 = vmatpush2.msra.mxu0 0.0
    %316 = vmatprep.subr.mxu0 0.0
    %317 = vmatpush2.msra.mxu0 0.0
    %318 = vmatprep.subr.mxu0 0.0
    %319 = vmatpush2.msra.mxu0 0.0
    %320 = vmatprep.subr.mxu0 0.0
    %321 = vmatpush2.msra.mxu0 0.0
    %322 = vmatprep.subr.mxu0 0.0
    %323 = vmatpush2.msra.mxu0 0.0
    %324 = vmatprep.mubr.f32.mxu0 0.0
    %325 = vmatmul.mubr.f32.gmra.mxu0 %v256
    %v326 = vpop.f32.mrf.mxu0
    %v327 = vadd.f32 0.0, %v326
    %v328 = vpop.f32.mrf.mxu0
    %329 = vdwg.mxu0
    %v331 = vsel %vm103, %v327, 0
    %v333 = vsel %vm107, %v327, 0
    %335 = vmatprep.subr.mxu0 0.0
    %336 = vmatpush1.msra.mxu0 0.0
    %337 = vmatprep.subr.mxu0 0.0
    %338 = vmatpush1.msra.mxu0 0.0
    %339 = vmatprep.subr.mxu0 0.0
    %340 = vmatpush1.msra.mxu0 0.0
    %341 = vmatprep.subr.mxu0 0.0
    %342 = vmatpush1.msra.mxu0 0.0
    %343 = vmatprep.subr.mxu0 0.0
    %344 = vmatpush1.msra.mxu0 0.0
    %345 = vmatprep.subr.mxu0 0.0
    %346 = vmatpush1.msra.mxu0 0.0
    %347 = vmatprep.subr.mxu0 0.0
    %348 = vmatpush1.msra.mxu0 0.0
    %349 = vmatprep.subr.mxu0 0.0
    %350 = vmatpush1.msra.mxu0 0.0
    %351 = vmatprep.subr.mxu0 0.0
    %352 = vmatpush1.msra.mxu0 0.0
    %353 = vmatprep.subr.mxu0 0.0
    %354 = vmatpush1.msra.mxu0 0.0
    %355 = vmatprep.subr.mxu0 0.0
    %356 = vmatpush1.msra.mxu0 0.0
    %357 = vmatprep.subr.mxu0 0.0
    %358 = vmatpush1.msra.mxu0 0.0
    %359 = vmatprep.subr.mxu0 0.0
    %360 = vmatpush1.msra.mxu0 0.0
    %361 = vmatprep.subr.mxu0 0.0
    %362 = vmatpush1.msra.mxu0 0.0
    %363 = vmatprep.subr.mxu0 0.0
    %364 = vmatpush1.msra.mxu0 0.0
    %365 = vmatprep.subr.mxu0 0.0
    %366 = vmatpush1.msra.mxu0 %v333
    %367 = vmatprep.subr.mxu0 0.0
    %368 = vmatpush2.msra.mxu0 0.0
    %369 = vmatprep.subr.mxu0 0.0
    %370 = vmatpush2.msra.mxu0 0.0
    %371 = vmatprep.subr.mxu0 0.0
    %372 = vmatpush2.msra.mxu0 0.0
    %373 = vmatprep.subr.mxu0 0.0
    %374 = vmatpush2.msra.mxu0 0.0
    %375 = vmatprep.subr.mxu0 0.0
    %376 = vmatpush2.msra.mxu0 0.0
    %377 = vmatprep.subr.mxu0 0.0
    %378 = vmatpush2.msra.mxu0 0.0
    %379 = vmatprep.subr.mxu0 0.0
    %380 = vmatpush2.msra.mxu0 0.0
    %381 = vmatprep.subr.mxu0 0.0
    %382 = vmatpush2.msra.mxu0 0.0
    %383 = vmatprep.subr.mxu0 0.0
    %384 = vmatpush2.msra.mxu0 0.0
    %385 = vmatprep.subr.mxu0 0.0
    %386 = vmatpush2.msra.mxu0 0.0
    %387 = vmatprep.subr.mxu0 0.0
    %388 = vmatpush2.msra.mxu0 0.0
    %389 = vmatprep.subr.mxu0 0.0
    %390 = vmatpush2.msra.mxu0 0.0
    %391 = vmatprep.subr.mxu0 0.0
    %392 = vmatpush2.msra.mxu0 0.0
    %393 = vmatprep.subr.mxu0 0.0
    %394 = vmatpush2.msra.mxu0 0.0
    %395 = vmatprep.subr.mxu0 0.0
    %396 = vmatpush2.msra.mxu0 0.0
    %397 = vmatprep.subr.mxu0 0.0
    %398 = vmatpush2.msra.mxu0 0.0
    %399 = vmatprep.mubr.f32.mxu0 0.0
    %400 = vmatmul.mubr.f32.gmra.mxu0 %v331
    %v401 = vpop.f32.mrf.mxu0
    %v402 = vadd.f32 0.0, %v401
    %v403 = vpop.f32.mrf.mxu0
    %404 = vdwg.mxu0
    %v406 = vsel %vm103, %v402, 0
    %v408 = vsel %vm107, %v402, 0
    %410 = vmatprep.subr.mxu0 0.0
    %411 = vmatpush1.msra.mxu0 0.0
    %412 = vmatprep.subr.mxu0 0.0
    %413 = vmatpush1.msra.mxu0 0.0
    %414 = vmatprep.subr.mxu0 0.0
    %415 = vmatpush1.msra.mxu0 0.0
    %416 = vmatprep.subr.mxu0 0.0
    %417 = vmatpush1.msra.mxu0 0.0
    %418 = vmatprep.subr.mxu0 0.0
    %419 = vmatpush1.msra.mxu0 0.0
    %420 = vmatprep.subr.mxu0 0.0
    %421 = vmatpush1.msra.mxu0 0.0
    %422 = vmatprep.subr.mxu0 0.0
    %423 = vmatpush1.msra.mxu0 0.0
    %424 = vmatprep.subr.mxu0 0.0
    %425 = vmatpush1.msra.mxu0 0.0
    %426 = vmatprep.subr.mxu0 0.0
    %427 = vmatpush1.msra.mxu0 0.0
    %428 = vmatprep.subr.mxu0 0.0
    %429 = vmatpush1.msra.mxu0 0.0
    %430 = vmatprep.subr.mxu0 0.0
    %431 = vmatpush1.msra.mxu0 0.0
    %432 = vmatprep.subr.mxu0 0.0
    %433 = vmatpush1.msra.mxu0 0.0
    %434 = vmatprep.subr.mxu0 0.0
    %435 = vmatpush1.msra.mxu0 0.0
    %436 = vmatprep.subr.mxu0 0.0
    %437 = vmatpush1.msra.mxu0 0.0
    %438 = vmatprep.subr.mxu0 0.0
    %439 = vmatpush1.msra.mxu0 0.0
    %440 = vmatprep.subr.mxu0 0.0
    %441 = vmatpush1.msra.mxu0 %v408
    %442 = vmatprep.subr.mxu0 0.0
    %443 = vmatpush2.msra.mxu0 0.0
    %444 = vmatprep.subr.mxu0 0.0
    %445 = vmatpush2.msra.mxu0 0.0
    %446 = vmatprep.subr.mxu0 0.0
    %447 = vmatpush2.msra.mxu0 0.0
    %448 = vmatprep.subr.mxu0 0.0
    %449 = vmatpush2.msra.mxu0 0.0
    %450 = vmatprep.subr.mxu0 0.0
    %451 = vmatpush2.msra.mxu0 0.0
    %452 = vmatprep.subr.mxu0 0.0
    %453 = vmatpush2.msra.mxu0 0.0
    %454 = vmatprep.subr.mxu0 0.0
    %455 = vmatpush2.msra.mxu0 0.0
    %456 = vmatprep.subr.mxu0 0.0
    %457 = vmatpush2.msra.mxu0 0.0
    %458 = vmatprep.subr.mxu0 0.0
    %459 = vmatpush2.msra.mxu0 0.0
    %460 = vmatprep.subr.mxu0 0.0
    %461 = vmatpush2.msra.mxu0 0.0
    %462 = vmatprep.subr.mxu0 0.0
    %463 = vmatpush2.msra.mxu0 0.0
    %464 = vmatprep.subr.mxu0 0.0
    %465 = vmatpush2.msra.mxu0 0.0
    %466 = vmatprep.subr.mxu0 0.0
    %467 = vmatpush2.msra.mxu0 0.0
    %468 = vmatprep.subr.mxu0 0.0
    %469 = vmatpush2.msra.mxu0 0.0
    %470 = vmatprep.subr.mxu0 0.0
    %471 = vmatpush2.msra.mxu0 0.0
    %472 = vmatprep.subr.mxu0 0.0
    %473 = vmatpush2.msra.mxu0 0.0
    %474 = vmatprep.mubr.f32.mxu0 0.0
    %475 = vmatmul.mubr.f32.gmra.mxu0 %v406
    %v476 = vpop.f32.mrf.mxu0
    %v477 = vadd.f32 0.0, %v476
    %v478 = vpop.f32.mrf.mxu0
    %479 = vdwg.mxu0
    %v481 = vsel %vm107, %v477, 0
    %483 = vmatprep.subr.mxu0 0.0
    %484 = vmatpush1.msra.mxu0 0.0
    %485 = vmatprep.subr.mxu0 0.0
    %486 = vmatpush1.msra.mxu0 0.0
    %487 = vmatprep.subr.mxu0 0.0
    %488 = vmatpush1.msra.mxu0 0.0
    %489 = vmatprep.subr.mxu0 0.0
    %490 = vmatpush1.msra.mxu0 0.0
    %491 = vmatprep.subr.mxu0 0.0
    %492 = vmatpush1.msra.mxu0 0.0
    %493 = vmatprep.subr.mxu0 0.0
    %494 = vmatpush1.msra.mxu0 0.0
    %495 = vmatprep.subr.mxu0 0.0
    %496 = vmatpush1.msra.mxu0 0.0
    %497 = vmatprep.subr.mxu0 0.0
    %498 = vmatpush1.msra.mxu0 0.0
    %499 = vmatprep.subr.mxu0 0.0
    %500 = vmatpush1.msra.mxu0 0.0
    %501 = vmatprep.subr.mxu0 0.0
    %502 = vmatpush1.msra.mxu0 0.0
    %503 = vmatprep.subr.mxu0 0.0
    %504 = vmatpush1.msra.mxu0 0.0
    %505 = vmatprep.subr.mxu0 0.0
    %506 = vmatpush1.msra.mxu0 0.0
    %507 = vmatprep.subr.mxu0 0.0
    %508 = vmatpush1.msra.mxu0 0.0
    %509 = vmatprep.subr.mxu0 0.0
    %510 = vmatpush1.msra.mxu0 0.0
    %511 = vmatprep.subr.mxu0 0.0
    %512 = vmatpush1.msra.mxu0 0.0
    %513 = vmatprep.subr.mxu0 0.0
    %514 = vmatpush1.msra.mxu0 %v481
    %515 = vmatprep.subr.mxu0 0.0
    %516 = vmatpush2.msra.mxu0 0.0
    %517 = vmatprep.subr.mxu0 0.0
    %518 = vmatpush2.msra.mxu0 0.0
    %519 = vmatprep.subr.mxu0 0.0
    %520 = vmatpush2.msra.mxu0 0.0
    %521 = vmatprep.subr.mxu0 0.0
    %522 = vmatpush2.msra.mxu0 0.0
    %523 = vmatprep.subr.mxu0 0.0
    %524 = vmatpush2.msra.mxu0 0.0
    %525 = vmatprep.subr.mxu0 0.0
    %526 = vmatpush2.msra.mxu0 0.0
    %527 = vmatprep.subr.mxu0 0.0
    %528 = vmatpush2.msra.mxu0 0.0
    %529 = vmatprep.subr.mxu0 0.0
    %530 = vmatpush2.msra.mxu0 0.0
    %531 = vmatprep.subr.mxu0 0.0
    %532 = vmatpush2.msra.mxu0 0.0
    %533 = vmatprep.subr.mxu0 0.0
    %534 = vmatpush2.msra.mxu0 0.0
    %535 = vmatprep.subr.mxu0 0.0
    %536 = vmatpush2.msra.mxu0 0.0
    %537 = vmatprep.subr.mxu0 0.0
    %538 = vmatpush2.msra.mxu0 0.0
    %539 = vmatprep.subr.mxu0 0.0
    %540 = vmatpush2.msra.mxu0 0.0
    %541 = vmatprep.subr.mxu0 0.0
    %542 = vmatpush2.msra.mxu0 0.0
    %543 = vmatprep.subr.mxu0 0.0
    %544 = vmatpush2.msra.mxu0 0.0
    %545 = vmatprep.subr.mxu0 0.0
    %546 = vmatpush2.msra.mxu0 0.0
    %547 = vmatprep.mubr.f32.mxu0 0.0
    %548 = vmatmul.mubr.f32.gmra.mxu0 %v256
    %v549 = vpop.f32.mrf.mxu0
    %v550 = vadd.f32 0.0, %v549
    %v551 = vpop.f32.mrf.mxu0
    %552 = vdwg.mxu0
    %v553 = vsel %vm103, %v477, 0
    %555 = vmatprep.subr.mxu0 0.0
    %556 = vmatpush1.msra.mxu0 0.0
    %557 = vmatprep.subr.mxu0 0.0
    %558 = vmatpush1.msra.mxu0 0.0
    %559 = vmatprep.subr.mxu0 0.0
    %560 = vmatpush1.msra.mxu0 0.0
    %561 = vmatprep.subr.mxu0 0.0
    %562 = vmatpush1.msra.mxu0 0.0
    %563 = vmatprep.subr.mxu0 0.0
    %564 = vmatpush1.msra.mxu0 0.0
    %565 = vmatprep.subr.mxu0 0.0
    %566 = vmatpush1.msra.mxu0 0.0
    %567 = vmatprep.subr.mxu0 0.0
    %568 = vmatpush1.msra.mxu0 0.0
    %569 = vmatprep.subr.mxu0 0.0
    %570 = vmatpush1.msra.mxu0 0.0
    %571 = vmatprep.subr.mxu0 0.0
    %572 = vmatpush1.msra.mxu0 0.0
    %573 = vmatprep.subr.mxu0 0.0
    %574 = vmatpush1.msra.mxu0 0.0
    %575 = vmatprep.subr.mxu0 0.0
    %576 = vmatpush1.msra.mxu0 0.0
    %577 = vmatprep.subr.mxu0 0.0
    %578 = vmatpush1.msra.mxu0 0.0
    %579 = vmatprep.subr.mxu0 0.0
    %580 = vmatpush1.msra.mxu0 0.0
    %581 = vmatprep.subr.mxu0 0.0
    %582 = vmatpush1.msra.mxu0 0.0
    %583 = vmatprep.subr.mxu0 0.0
    %584 = vmatpush1.msra.mxu0 0.0
    %585 = vmatprep.subr.mxu0 0.0
    %586 = vmatpush1.msra.mxu0 %v481
    %587 = vmatprep.subr.mxu0 0.0
    %588 = vmatpush2.msra.mxu0 0.0
    %589 = vmatprep.subr.mxu0 0.0
    %590 = vmatpush2.msra.mxu0 0.0
    %591 = vmatprep.subr.mxu0 0.0
    %592 = vmatpush2.msra.mxu0 0.0
    %593 = vmatprep.subr.mxu0 0.0
    %594 = vmatpush2.msra.mxu0 0.0
    %595 = vmatprep.subr.mxu0 0.0
    %596 = vmatpush2.msra.mxu0 0.0
    %597 = vmatprep.subr.mxu0 0.0
    %598 = vmatpush2.msra.mxu0 0.0
    %599 = vmatprep.subr.mxu0 0.0
    %600 = vmatpush2.msra.mxu0 0.0
    %601 = vmatprep.subr.mxu0 0.0
    %602 = vmatpush2.msra.mxu0 0.0
    %603 = vmatprep.subr.mxu0 0.0
    %604 = vmatpush2.msra.mxu0 0.0
    %605 = vmatprep.subr.mxu0 0.0
    %606 = vmatpush2.msra.mxu0 0.0
    %607 = vmatprep.subr.mxu0 0.0
    %608 = vmatpush2.msra.mxu0 0.0
    %609 = vmatprep.subr.mxu0 0.0
    %610 = vmatpush2.msra.mxu0 0.0
    %611 = vmatprep.subr.mxu0 0.0
    %612 = vmatpush2.msra.mxu0 0.0
    %613 = vmatprep.subr.mxu0 0.0
    %614 = vmatpush2.msra.mxu0 0.0
    %615 = vmatprep.subr.mxu0 0.0
    %616 = vmatpush2.msra.mxu0 0.0
    %617 = vmatprep.subr.mxu0 0.0
    %618 = vmatpush2.msra.mxu0 0.0
    %619 = vmatprep.mubr.f32.mxu0 0.0
    %620 = vmatmul.mubr.f32.gmra.mxu0 %v553
    %v621 = vpop.f32.mrf.mxu0
    %v622 = vadd.f32 0.0, %v621
    %v623 = vpop.f32.mrf.mxu0
    %624 = vdwg.mxu0
    %v626 = vsel %vm103, %v550, 0
    %v629 = vsel %vm107, %v622, 0
    %631 = vmatprep.subr.mxu0 0.0
    %632 = vmatpush1.msra.mxu0 0.0
    %633 = vmatprep.subr.mxu0 0.0
    %634 = vmatpush1.msra.mxu0 0.0
    %635 = vmatprep.subr.mxu0 0.0
    %636 = vmatpush1.msra.mxu0 0.0
    %637 = vmatprep.subr.mxu0 0.0
    %638 = vmatpush1.msra.mxu0 0.0
    %639 = vmatprep.subr.mxu0 0.0
    %640 = vmatpush1.msra.mxu0 0.0
    %641 = vmatprep.subr.mxu0 0.0
    %642 = vmatpush1.msra.mxu0 0.0
    %643 = vmatprep.subr.mxu0 0.0
    %644 = vmatpush1.msra.mxu0 0.0
    %645 = vmatprep.subr.mxu0 0.0
    %646 = vmatpush1.msra.mxu0 0.0
    %647 = vmatprep.subr.mxu0 0.0
    %648 = vmatpush1.msra.mxu0 0.0
    %649 = vmatprep.subr.mxu0 0.0
    %650 = vmatpush1.msra.mxu0 0.0
    %651 = vmatprep.subr.mxu0 0.0
    %652 = vmatpush1.msra.mxu0 0.0
    %653 = vmatprep.subr.mxu0 0.0
    %654 = vmatpush1.msra.mxu0 0.0
    %655 = vmatprep.subr.mxu0 0.0
    %656 = vmatpush1.msra.mxu0 0.0
    %657 = vmatprep.subr.mxu0 0.0
    %658 = vmatpush1.msra.mxu0 0.0
    %659 = vmatprep.subr.mxu0 0.0
    %660 = vmatpush1.msra.mxu0 0.0
    %661 = vmatprep.subr.mxu0 0.0
    %662 = vmatpush1.msra.mxu0 %v629
    %663 = vmatprep.subr.mxu0 0.0
    %664 = vmatpush2.msra.mxu0 0.0
    %665 = vmatprep.subr.mxu0 0.0
    %666 = vmatpush2.msra.mxu0 0.0
    %667 = vmatprep.subr.mxu0 0.0
    %668 = vmatpush2.msra.mxu0 0.0
    %669 = vmatprep.subr.mxu0 0.0
    %670 = vmatpush2.msra.mxu0 0.0
    %671 = vmatprep.subr.mxu0 0.0
    %672 = vmatpush2.msra.mxu0 0.0
    %673 = vmatprep.subr.mxu0 0.0
    %674 = vmatpush2.msra.mxu0 0.0
    %675 = vmatprep.subr.mxu0 0.0
    %676 = vmatpush2.msra.mxu0 0.0
    %677 = vmatprep.subr.mxu0 0.0
    %678 = vmatpush2.msra.mxu0 0.0
    %679 = vmatprep.subr.mxu0 0.0
    %680 = vmatpush2.msra.mxu0 0.0
    %681 = vmatprep.subr.mxu0 0.0
    %682 = vmatpush2.msra.mxu0 0.0
    %683 = vmatprep.subr.mxu0 0.0
    %684 = vmatpush2.msra.mxu0 0.0
    %685 = vmatprep.subr.mxu0 0.0
    %686 = vmatpush2.msra.mxu0 0.0
    %687 = vmatprep.subr.mxu0 0.0
    %688 = vmatpush2.msra.mxu0 0.0
    %689 = vmatprep.subr.mxu0 0.0
    %690 = vmatpush2.msra.mxu0 0.0
    %691 = vmatprep.subr.mxu0 0.0
    %692 = vmatpush2.msra.mxu0 0.0
    %693 = vmatprep.subr.mxu0 0.0
    %694 = vmatpush2.msra.mxu0 0.0
    %695 = vmatprep.mubr.f32.mxu0 0.0
    %696 = vmatmul.mubr.f32.gmra.mxu0 %v626
    %v697 = vpop.f32.mrf.mxu0
    %v698 = vadd.f32 0.0, %v697
    %v699 = vpop.f32.mrf.mxu0
    %700 = vdwg.mxu0
    %v701 = vld [vmem:[%s0] sm:$0x3]
    %v703 = vsel %vm103, %v701, 0
    %v706 = vsel %vm107, %v698, 0
    %708 = vmatprep.subr.mxu0 0.0
    %709 = vmatpush1.msra.mxu0 0.0
    %710 = vmatprep.subr.mxu0 0.0
    %711 = vmatpush1.msra.mxu0 0.0
    %712 = vmatprep.subr.mxu0 0.0
    %713 = vmatpush1.msra.mxu0 0.0
    %714 = vmatprep.subr.mxu0 0.0
    %715 = vmatpush1.msra.mxu0 0.0
    %716 = vmatprep.subr.mxu0 0.0
    %717 = vmatpush1.msra.mxu0 0.0
    %718 = vmatprep.subr.mxu0 0.0
    %719 = vmatpush1.msra.mxu0 0.0
    %720 = vmatprep.subr.mxu0 0.0
    %721 = vmatpush1.msra.mxu0 0.0
    %722 = vmatprep.subr.mxu0 0.0
    %723 = vmatpush1.msra.mxu0 0.0
    %724 = vmatprep.subr.mxu0 0.0
    %725 = vmatpush1.msra.mxu0 0.0
    %726 = vmatprep.subr.mxu0 0.0
    %727 = vmatpush1.msra.mxu0 0.0
    %728 = vmatprep.subr.mxu0 0.0
    %729 = vmatpush1.msra.mxu0 0.0
    %730 = vmatprep.subr.mxu0 0.0
    %731 = vmatpush1.msra.mxu0 0.0
    %732 = vmatprep.subr.mxu0 0.0
    %733 = vmatpush1.msra.mxu0 0.0
    %734 = vmatprep.subr.mxu0 0.0
    %735 = vmatpush1.msra.mxu0 0.0
    %736 = vmatprep.subr.mxu0 0.0
    %737 = vmatpush1.msra.mxu0 0.0
    %738 = vmatprep.subr.mxu0 0.0
    %739 = vmatpush1.msra.mxu0 %v706
    %740 = vmatprep.subr.mxu0 0.0
    %741 = vmatpush2.msra.mxu0 0.0
    %742 = vmatprep.subr.mxu0 0.0
    %743 = vmatpush2.msra.mxu0 0.0
    %744 = vmatprep.subr.mxu0 0.0
    %745 = vmatpush2.msra.mxu0 0.0
    %746 = vmatprep.subr.mxu0 0.0
    %747 = vmatpush2.msra.mxu0 0.0
    %748 = vmatprep.subr.mxu0 0.0
    %749 = vmatpush2.msra.mxu0 0.0
    %750 = vmatprep.subr.mxu0 0.0
    %751 = vmatpush2.msra.mxu0 0.0
    %752 = vmatprep.subr.mxu0 0.0
    %753 = vmatpush2.msra.mxu0 0.0
    %754 = vmatprep.subr.mxu0 0.0
    %755 = vmatpush2.msra.mxu0 0.0
    %756 = vmatprep.subr.mxu0 0.0
    %757 = vmatpush2.msra.mxu0 0.0
    %758 = vmatprep.subr.mxu0 0.0
    %759 = vmatpush2.msra.mxu0 0.0
    %760 = vmatprep.subr.mxu0 0.0
    %761 = vmatpush2.msra.mxu0 0.0
    %762 = vmatprep.subr.mxu0 0.0
    %763 = vmatpush2.msra.mxu0 0.0
    %764 = vmatprep.subr.mxu0 0.0
    %765 = vmatpush2.msra.mxu0 0.0
    %766 = vmatprep.subr.mxu0 0.0
    %767 = vmatpush2.msra.mxu0 0.0
    %768 = vmatprep.subr.mxu0 0.0
    %769 = vmatpush2.msra.mxu0 0.0
    %770 = vmatprep.subr.mxu0 0.0
    %771 = vmatpush2.msra.mxu0 0.0
    %772 = vmatprep.mubr.f32.mxu0 0.0
    %773 = vmatmul.mubr.f32.gmra.mxu0 %v703
    %v774 = vpop.f32.mrf.mxu0
    %v775 = vadd.f32 0.0, %v774
    %v776 = vpop.f32.mrf.mxu0
    %777 = vdwg.mxu0
    %v778 = vld [vmem:[%s4] sm:$0x1]
    %v780 = vlaneseq
    %v781 = vshrl.u32 %v780, 7
    %v782 = vsub.s32 0, %v781
    %v783 = vrot.slane %v778, %v782
    %v785 = vmul.f32 %v783, %v775
    %v786 = vmul.f32 %v785, %v775
    %vm787 = vcmask 41984
    %v788 = vsel %vm787, %v786, 0.0
    %789 = vadd.xlane.f32.xlu0 %v788
    %v790 = vpop.xlane.xlu0 %789
    %v791 = vrot.slane %v790, 4
    %v792 = vadd.f32 %v790, %v791
    %v793 = vrot.slane %v792, 2
    %v794 = vadd.f32 %v792, %v793
    %v795 = vrot.slane %v794, 1
    %v796 = vadd.f32 %v794, %v795
    %s797 = vtos %v796
    %v798 = vstv %s797
    %vm799 = vcmask 0
    %800 = vst.msk [vmem:[#allocation2] sm:$0x1] %vm799, %v798
    // Predicated region
    $region22: #{tpu_custom_call.1} parent=1 // pred_check
      _
    $region23: #{tpu_custom_call.1} parent=1 // pred_check_branch
      %802 = sbr.rel (0) target = $region25
    $region24: #{tpu_custom_call.1} parent=1 // pred_region
      %s804 = ssub.s32 16, 16
      %805 = vsyncadd [#allocation3], %s804
      %s807 = sshll.u32 [#allocation2], 4
      %s808 = int_to_ptr.vmem [resolvable:$true] %s807
      %810 = dma.vmem_to_hbm [thread:$0]  %s808, 16, %s5, [#allocation3]
    $region25: #{tpu_custom_call.1} parent=1 // pred_fallthru
      _
    // Predicated region
    $region26: #{tpu_custom_call.1} parent=1 // pred_check
      _
    $region27: #{tpu_custom_call.1} parent=1 // pred_check_branch
      %812 = sbr.rel (0) target = $region29
    $region28: #{tpu_custom_call.1} parent=1 // pred_region
      %813 = dma.done [#allocation3], 16
    $region29: #{tpu_custom_call.1} parent=1 // pred_fallthru
      _
    %814 = vsyncpa [#allocation3], 1

</llo_original>
